<compile_context>
chip_gen: v6e
topology: v6e:2x2x1
jax: 0.10.0
libtpu: 0.0.40
codegen_flags: <defaults>
</compile_context>

<pallas_src>
import functools

import jax
import jax.numpy as jnp
from jax import lax
from jax.experimental import pallas as pl
from jax.experimental.pallas import tpu as pltpu


_VMEM_LIMIT = 48 * 1024 * 1024  # leave headroom below v7x's 64 MiB


def _tile(dim, target, align):
    """Largest tile <= target that divides dim and is a multiple of align."""
    if dim <= target:
        return dim
    t = (target // align) * align
    while t >= align:
        if dim % t == 0:
            return t
        t -= align
    return dim


# ----------------------------------------------------------------------------
# Tiled dense: (x @ W + b) with optional exact GELU.  bf16 in, f32 accumulate.
# ----------------------------------------------------------------------------
def _dense_kernel(x_ref, w_ref, b_ref, o_ref, acc_ref, *, act):
    @pl.when(pl.program_id(2) == 0)
    def _():
        acc_ref[...] = jnp.zeros_like(acc_ref)

    acc_ref[...] += jnp.dot(x_ref[...], w_ref[...],
                            preferred_element_type=jnp.float32)

    @pl.when(pl.program_id(2) == pl.num_programs(2) - 1)
    def _():
        y = acc_ref[...] + b_ref[...].astype(jnp.float32)
        if act == "gelu":
            y = jax.nn.gelu(y, approximate=False)   # exact erf GELU (BERT)
        o_ref[...] = y.astype(o_ref.dtype)


def dense(x, w, b, act="none", out_dtype=jnp.bfloat16,
          tm=256, tn=256, tk=512):
    M, K = x.shape
    N = w.shape[1]
    bm = _tile(M, tm, 8)
    bn = _tile(N, tn, 128)
    bk = _tile(K, tk, 128)
    grid = (M // bm, N // bn, K // bk)
    return pl.pallas_call(
        functools.partial(_dense_kernel, act=act),
        out_shape=jax.ShapeDtypeStruct((M, N), out_dtype),
        grid=grid,
        in_specs=[
            pl.BlockSpec((bm, bk), lambda i, j, k: (i, k)),
            pl.BlockSpec((bk, bn), lambda i, j, k: (k, j)),
            pl.BlockSpec((1, bn), lambda i, j, k: (0, j)),
        ],
        out_specs=pl.BlockSpec((bm, bn), lambda i, j, k: (i, j)),
        scratch_shapes=[pltpu.VMEM((bm, bn), jnp.float32)],
        compiler_params=pltpu.CompilerParams(
            dimension_semantics=("parallel", "parallel", "arbitrary"),
            vmem_limit_bytes=_VMEM_LIMIT),
    )(x, w, b.reshape(1, N))


# ----------------------------------------------------------------------------
# LayerNorm (BERT eps=1e-12), tiled over rows, optional fused residual add.
# ----------------------------------------------------------------------------
def _ln_core(x, g_ref, b_ref, o_ref, eps):
    mu = jnp.mean(x, axis=-1, keepdims=True)
    var = jnp.mean(jnp.square(x - mu), axis=-1, keepdims=True)
    y = (x - mu) * lax.rsqrt(var + eps)
    o_ref[...] = (y * g_ref[...].astype(jnp.float32)
                  + b_ref[...].astype(jnp.float32)).astype(o_ref.dtype)


def _ln_kernel(x_ref, g_ref, b_ref, o_ref, *, eps):
    _ln_core(x_ref[...].astype(jnp.float32), g_ref, b_ref, o_ref, eps)


def _add_ln_kernel(x_ref, r_ref, g_ref, b_ref, o_ref, *, eps):
    _ln_core(x_ref[...].astype(jnp.float32) + r_ref[...].astype(jnp.float32),
             g_ref, b_ref, o_ref, eps)


def layernorm(x, g, b, residual=None, eps=1e-12, out_dtype=jnp.bfloat16, tm=256):
    M, H = x.shape
    bm = _tile(M, tm, 8)
    row_spec = pl.BlockSpec((bm, H), lambda i: (i, 0))
    vec_spec = pl.BlockSpec((1, H), lambda i: (0, 0))
    if residual is None:
        kernel = functools.partial(_ln_kernel, eps=eps)
        args = (x, g.reshape(1, H), b.reshape(1, H))
        in_specs = [row_spec, vec_spec, vec_spec]
    else:
        kernel = functools.partial(_add_ln_kernel, eps=eps)
        args = (x, residual, g.reshape(1, H), b.reshape(1, H))
        in_specs = [row_spec, row_spec, vec_spec, vec_spec]
    return pl.pallas_call(
        kernel,
        out_shape=jax.ShapeDtypeStruct((M, H), out_dtype),
        grid=(M // bm,),
        in_specs=in_specs,
        out_specs=row_spec,
        compiler_params=pltpu.CompilerParams(
            dimension_semantics=("parallel",),
            vmem_limit_bytes=_VMEM_LIMIT),
    )(*args)


# ----------------------------------------------------------------------------
# Attention: one grid step per batch element, all heads processed in-kernel
# from the fused QKV activation (no XLA head-split transposes, mask kept (B,1,S)).
# ----------------------------------------------------------------------------
def _attn_kernel(q_ref, k_ref, v_ref, m_ref, o_ref, *, nheads, scale):
    S, H = q_ref.shape[1], q_ref.shape[2]
    dh = H // nheads
    q = q_ref[0].reshape(S, nheads, dh)
    k = k_ref[0].reshape(S, nheads, dh)
    v = v_ref[0].reshape(S, nheads, dh)
    s = jnp.einsum("qnd,knd->nqk", q, k,
                   preferred_element_type=jnp.float32) * scale
    s = s + m_ref[0]                           # (1,S) additive mask over keys
    s = s - jnp.max(s, axis=-1, keepdims=True)
    p = jnp.exp(s)
    p = p / jnp.sum(p, axis=-1, keepdims=True)
    ctx = jnp.einsum("nqk,knd->qnd", p.astype(v.dtype), v,
                     preferred_element_type=jnp.float32)
    o_ref[0] = ctx.reshape(S, H).astype(o_ref.dtype)


def mha_attention(qkv, mask_add, nheads, scale, out_dtype=jnp.bfloat16):
    B, S, H3 = qkv.shape
    H = H3 // 3
    qkv_spec = lambda off: pl.BlockSpec((1, S, H), lambda b, o=off: (b, 0, o))
    return pl.pallas_call(
        functools.partial(_attn_kernel, nheads=nheads, scale=scale),
        out_shape=jax.ShapeDtypeStruct((B, S, H), out_dtype),
        grid=(B,),
        in_specs=[
            qkv_spec(0),                                  # Q slab
            qkv_spec(1),                                  # K slab
            qkv_spec(2),                                  # V slab
            pl.BlockSpec((1, 1, S), lambda b: (b, 0, 0)),  # additive mask
        ],
        out_specs=pl.BlockSpec((1, S, H), lambda b: (b, 0, 0)),
        compiler_params=pltpu.CompilerParams(
            dimension_semantics=("parallel",),
            vmem_limit_bytes=_VMEM_LIMIT),
    )(qkv, qkv, qkv, mask_add)


# ----------------------------------------------------------------------------
# Bidirectional LSTM, both directions in ONE kernel, grid over time.
# xg holds the pre-projected input gates for both directions: (T, B, 8H) with
# [:, :, :4H] = forward gates, [:, :, 4H:] = backward gates.  The backward
# direction's time reversal is done in the index_map (no data copy).
# h/c live in VMEM scratch across grid steps; only the final hidden is emitted.
# PyTorch gate order: i, f, g, o.
# ----------------------------------------------------------------------------
def _bilstm_kernel(xgf_ref, xgb_ref, whh_ref, o_ref, h_ref, c_ref, *, hidden):
    t = pl.program_id(0)
    T = pl.num_programs(0)
    H = hidden

    @pl.when(t == 0)
    def _():
        h_ref[...] = jnp.zeros_like(h_ref)
        c_ref[...] = jnp.zeros_like(c_ref)

    for d, xg_ref in ((0, xgf_ref), (1, xgb_ref)):
        h = h_ref[d]
        c = c_ref[d]
        gates = xg_ref[0].astype(jnp.float32) + jnp.dot(
            h.astype(whh_ref.dtype), whh_ref[d],
            preferred_element_type=jnp.float32)
        i_g = jax.nn.sigmoid(gates[:, 0 * H:1 * H])
        f_g = jax.nn.sigmoid(gates[:, 1 * H:2 * H])
        g_g = jnp.tanh(gates[:, 2 * H:3 * H])
        o_g = jax.nn.sigmoid(gates[:, 3 * H:4 * H])
        c_new = f_g * c + i_g * g_g
        h_new = o_g * jnp.tanh(c_new)
        c_ref[d] = c_new
        h_ref[d] = h_new

    @pl.when(t == T - 1)
    def _():
        o_ref[...] = h_ref[...]


def bilstm_last_hidden(xg, whh, hidden):
    T, B, _ = xg.shape
    G = 4 * hidden
    return pl.pallas_call(
        functools.partial(_bilstm_kernel, hidden=hidden),
        out_shape=jax.ShapeDtypeStruct((2, B, hidden), jnp.float32),
        grid=(T,),
        in_specs=[
            pl.BlockSpec((1, B, G), lambda t: (t, 0, 0)),           # fwd gates
            pl.BlockSpec((1, B, G), lambda t: (T - 1 - t, 0, 1)),   # bwd gates (reversed)
            pl.BlockSpec((2, hidden, G), lambda t: (0, 0, 0)),      # W_hh (resident)
        ],
        out_specs=pl.BlockSpec((2, B, hidden), lambda t: (0, 0, 0)),
        scratch_shapes=[pltpu.VMEM((2, B, hidden), jnp.float32),    # h
                        pltpu.VMEM((2, B, hidden), jnp.float32)],   # c
        compiler_params=pltpu.CompilerParams(
            dimension_semantics=("arbitrary",),
            vmem_limit_bytes=_VMEM_LIMIT),
    )(xg, xg, whh)


# ----------------------------------------------------------------------------
# Fused (dropout x2) + final Linear.  The Bernoulli keep-masks are drawn with
# jax.random in the wrapper and combined into one scale array.
# TODO(synk): TPU hardware PRNG (pltpu.prng_*) has no interpret/CPU lowering,
#             so the dropout mask is host-side jax.random (stream differs from torch).
# ----------------------------------------------------------------------------
def _drop_linear_kernel(x_ref, m_ref, w_ref, b_ref, o_ref):
    x = x_ref[...].astype(jnp.float32) * m_ref[...]
    y = jnp.dot(x.astype(w_ref.dtype), w_ref[...],
                preferred_element_type=jnp.float32)
    o_ref[...] = (y + b_ref[...].astype(jnp.float32)).astype(o_ref.dtype)


def dropout_linear(x, mask_scale, w, b):
    M, K = x.shape
    N = w.shape[1]
    return pl.pallas_call(
        _drop_linear_kernel,
        out_shape=jax.ShapeDtypeStruct((M, N), jnp.float32),
        grid=(1,),
        in_specs=[
            pl.BlockSpec((M, K), lambda i: (0, 0)),
            pl.BlockSpec((M, K), lambda i: (0, 0)),
            pl.BlockSpec((K, N), lambda i: (0, 0)),
            pl.BlockSpec((1, N), lambda i: (0, 0)),
        ],
        out_specs=pl.BlockSpec((M, N), lambda i: (0, 0)),
    )(x, mask_scale, w, b.reshape(1, N))


# ----------------------------------------------------------------------------
# Parameters (deterministic synthetic init — no checkpoint loading).
# ----------------------------------------------------------------------------
def make_params(key, cfg):
    V, H, I = cfg["vocab"], cfg["hidden"], cfg["intermediate"]
    L, S, out_dim = cfg["layers"], cfg["seq_len"], cfg["out_dim"]
    ks = iter(jax.random.split(key, 64))

    def nrm(shape, std=0.02):
        return (std * jax.random.normal(next(ks), shape)).astype(jnp.float32)

    params = {
        "word_emb": nrm((V, H)),
        "pos_emb": nrm((S, H)),
        "type_emb": nrm((2, H)),
        "emb_ln_g": jnp.ones((H,), jnp.float32),
        "emb_ln_b": jnp.zeros((H,), jnp.float32),
        "layers": [],
    }
    for _ in range(L):
        params["layers"].append({
            "wq": nrm((H, H)), "bq": jnp.zeros((H,), jnp.float32),
            "wk": nrm((H, H)), "bk": jnp.zeros((H,), jnp.float32),
            "wv": nrm((H, H)), "bv": jnp.zeros((H,), jnp.float32),
            "wo": nrm((H, H)), "bo": jnp.zeros((H,), jnp.float32),
            "ln1_g": jnp.ones((H,), jnp.float32), "ln1_b": jnp.zeros((H,), jnp.float32),
            "w1": nrm((H, I)), "b1": jnp.zeros((I,), jnp.float32),
            "w2": nrm((I, H)), "b2": jnp.zeros((H,), jnp.float32),
            "ln2_g": jnp.ones((H,), jnp.float32), "ln2_b": jnp.zeros((H,), jnp.float32),
        })
    # PyTorch LSTM convention: weight_ih/hh of shape (4H, H), biases (4H,).
    params["lstm"] = {
        "w_ih_f": nrm((4 * H, H), 0.1), "w_hh_f": nrm((4 * H, H), 0.1),
        "b_ih_f": jnp.zeros((4 * H,), jnp.float32), "b_hh_f": jnp.zeros((4 * H,), jnp.float32),
        "w_ih_b": nrm((4 * H, H), 0.1), "w_hh_b": nrm((4 * H, H), 0.1),
        "b_ih_b": jnp.zeros((4 * H,), jnp.float32), "b_hh_b": jnp.zeros((4 * H,), jnp.float32),
    }
    params["lin_w"] = nrm((2 * H, out_dim))
    params["lin_b"] = jnp.zeros((out_dim,), jnp.float32)
    return params


# ----------------------------------------------------------------------------
# Full forward:  BERT encoder -> bi-LSTM -> dropout(x2) -> Linear
# ----------------------------------------------------------------------------
def bert_lstm_forward(params, input_ids, attention_mask, cfg,
                      train_mode=True, dropout_key=None):
    B, S = input_ids.shape
    H, nH = cfg["hidden"], cfg["heads"]
    dh = H // nH
    bf16 = jnp.bfloat16

    # --- BERT embeddings (gather = glue) + Pallas layernorm ---
    x = (params["word_emb"][input_ids]
         + params["pos_emb"][None, :S, :]
         + params["type_emb"][0][None, None, :])
    x2d = layernorm(x.reshape(B * S, H), params["emb_ln_g"], params["emb_ln_b"],
                    out_dtype=bf16)

    # additive attention mask, kept as (B, 1, S); indexed per batch in the kernel
    mask_add = ((1.0 - attention_mask.astype(jnp.float32)) * -10000.0)[:, None, :]

    # --- BERT transformer layers ---
    for lyr in params["layers"]:
        wqkv = jnp.concatenate([lyr["wq"], lyr["wk"], lyr["wv"]], axis=1).astype(bf16)
        bqkv = jnp.concatenate([lyr["bq"], lyr["bk"], lyr["bv"]], axis=0)
        qkv = dense(x2d, wqkv, bqkv, out_dtype=bf16)                 # (B*S, 3H)
        ctx = mha_attention(qkv.reshape(B, S, 3 * H), mask_add, nH,
                            scale=1.0 / (dh ** 0.5), out_dtype=bf16)  # (B, S, H)
        attn_out = dense(ctx.reshape(B * S, H), lyr["wo"].astype(bf16),
                         lyr["bo"], out_dtype=bf16)
        x2d = layernorm(attn_out, lyr["ln1_g"], lyr["ln1_b"],
                        residual=x2d, out_dtype=bf16)
        ffn = dense(dense(x2d, lyr["w1"].astype(bf16), lyr["b1"],
                          act="gelu", out_dtype=bf16),
                    lyr["w2"].astype(bf16), lyr["b2"], out_dtype=bf16)
        x2d = layernorm(ffn, lyr["ln2_g"], lyr["ln2_b"],
                        residual=x2d, out_dtype=bf16)

    # encoded_layers.permute(1, 0, 2): (B,S,H) -> time-major (S,B,H)
    enc = x2d.reshape(B, S, H).transpose(1, 0, 2)

    # --- bidirectional LSTM: one fused input projection for both directions,
    #     then one Pallas kernel over time for both directions.
    lstm = params["lstm"]
    w_ih = jnp.concatenate([lstm["w_ih_f"].T, lstm["w_ih_b"].T], axis=1).astype(bf16)  # (H, 8H)
    b_ih = jnp.concatenate([lstm["b_ih_f"] + lstm["b_hh_f"],
                            lstm["b_ih_b"] + lstm["b_hh_b"]], axis=0)                   # (8H,)
    xg = dense(enc.reshape(S * B, H), w_ih, b_ih, out_dtype=bf16).reshape(S, B, 8 * H)
    whh = jnp.stack([lstm["w_hh_f"].T, lstm["w_hh_b"].T], axis=0).astype(bf16)          # (2, H, 4H)
    last_h = bilstm_last_hidden(xg, whh, H)                                             # (2, B, H)

    # torch.cat((last_hidden[0], last_hidden[1]), dim=1)
    out_hidden = jnp.concatenate([last_h[0], last_h[1]], axis=1)                        # (B, 2H)

    # F.dropout defaults to training=True, so the first dropout is always live.
    if dropout_key is None:
        dropout_key = jax.random.PRNGKey(0)
    k1, k2 = jax.random.split(dropout_key)
    rate = 0.2
    scale = jax.random.bernoulli(k1, 1.0 - rate, out_hidden.shape).astype(jnp.float32)
    scale = scale / (1.0 - rate)
    if train_mode:
        m2 = jax.random.bernoulli(k2, 1.0 - rate, out_hidden.shape).astype(jnp.float32)
        scale = scale * m2 / (1.0 - rate)

    return dropout_linear(out_hidden, scale,
                          params["lin_w"].astype(bf16), params["lin_b"])


if __name__ == "__main__":
    cfg = dict(vocab=100, hidden=32, heads=4, intermediate=64,
               layers=2, seq_len=8, out_dim=16, batch=2)
    key = jax.random.PRNGKey(0)
    pkey, dkey, mkey = jax.random.split(key, 3)
    params = make_params(pkey, cfg)

    input_ids = jax.random.randint(dkey, (cfg["batch"], cfg["seq_len"]),
                                   0, cfg["vocab"], dtype=jnp.int32)
    attention_mask = jnp.ones((cfg["batch"], cfg["seq_len"]), dtype=jnp.int32)

    out = bert_lstm_forward(params, input_ids, attention_mask, cfg,
                            train_mode=True, dropout_key=mkey)
    out = jax.block_until_ready(out)
    assert out.shape == (cfg["batch"], cfg["out_dim"])
    assert out.dtype == jnp.float32
    assert bool(jnp.all(jnp.isfinite(out)))
    print("KERNEL_OK")
</pallas_src>

<mosaic_0001>
module attributes {stable_mosaic.version = 11 : i64} {
  func.func @_ln_kernel(%arg0: i32, %arg1: memref<16x32xf32, #tpu.memory_space<vmem>>, %arg2: memref<1x32xf32, #tpu.memory_space<vmem>>, %arg3: memref<1x32xf32, #tpu.memory_space<vmem>>, %arg4: memref<16x32xbf16, #tpu.memory_space<vmem>>) attributes {dimension_semantics = [#tpu.dimension_semantics<parallel>], iteration_bounds = array<i64: 1>, scalar_prefetch = 0 : i64, scratch_operands = 0 : i64, tpu.core_type = #tpu.core_type<tc>, window_params = [{transform_indices = @transform_0, window_bounds = array<i64: 16, 32>}, {pipeline_mode = #tpu.pipeline_mode<synchronous>, transform_indices = @transform_1, window_bounds = array<i64: 1, 32>}, {pipeline_mode = #tpu.pipeline_mode<synchronous>, transform_indices = @transform_2, window_bounds = array<i64: 1, 32>}, {transform_indices = @transform_3, window_bounds = array<i64: 16, 32>}]} {
    %c0 = arith.constant 0 : index
    %c0_0 = arith.constant 0 : index
    %0 = vector.load %arg1[%c0, %c0_0] : memref<16x32xf32, #tpu.memory_space<vmem>>, vector<16x32xf32>
    %cst = arith.constant dense<0.000000e+00> : vector<16xf32>
    %1 = vector.multi_reduction <add>, %0, %cst [1] : vector<16x32xf32> to vector<16xf32>
    %2 = vector.shape_cast %1 : vector<16xf32> to vector<16x1xf32>
    %cst_1 = arith.constant 3.200000e+01 : f32
    %3 = vector.broadcast %cst_1 : f32 to vector<16x1xf32>
    %4 = arith.divf %2, %3 : vector<16x1xf32>
    %5 = vector.broadcast %4 : vector<16x1xf32> to vector<16x32xf32>
    %6 = arith.subf %0, %5 : vector<16x32xf32>
    %7 = arith.mulf %6, %6 : vector<16x32xf32>
    %cst_2 = arith.constant dense<0.000000e+00> : vector<16xf32>
    %8 = vector.multi_reduction <add>, %7, %cst_2 [1] : vector<16x32xf32> to vector<16xf32>
    %9 = vector.shape_cast %8 : vector<16xf32> to vector<16x1xf32>
    %cst_3 = arith.constant 3.200000e+01 : f32
    %10 = vector.broadcast %cst_3 : f32 to vector<16x1xf32>
    %11 = arith.divf %9, %10 : vector<16x1xf32>
    %12 = vector.broadcast %4 : vector<16x1xf32> to vector<16x32xf32>
    %13 = arith.subf %0, %12 : vector<16x32xf32>
    %cst_4 = arith.constant 9.99999996E-13 : f32
    %14 = vector.broadcast %cst_4 : f32 to vector<16x1xf32>
    %15 = arith.addf %11, %14 : vector<16x1xf32>
    %16 = math.rsqrt %15 : vector<16x1xf32>
    %17 = vector.broadcast %16 : vector<16x1xf32> to vector<16x32xf32>
    %18 = arith.mulf %13, %17 : vector<16x32xf32>
    %c0_5 = arith.constant 0 : index
    %c0_6 = arith.constant 0 : index
    %19 = vector.load %arg2[%c0_5, %c0_6] : memref<1x32xf32, #tpu.memory_space<vmem>>, vector<1x32xf32>
    %20 = vector.broadcast %19 : vector<1x32xf32> to vector<16x32xf32>
    %21 = arith.mulf %18, %20 : vector<16x32xf32>
    %c0_7 = arith.constant 0 : index
    %c0_8 = arith.constant 0 : index
    %22 = vector.load %arg3[%c0_7, %c0_8] : memref<1x32xf32, #tpu.memory_space<vmem>>, vector<1x32xf32>
    %23 = vector.broadcast %22 : vector<1x32xf32> to vector<16x32xf32>
    %24 = arith.addf %21, %23 : vector<16x32xf32>
    %25 = arith.truncf %24 : vector<16x32xf32> to vector<16x32xbf16>
    %c0_9 = arith.constant 0 : index
    %c0_10 = arith.constant 0 : index
    %26 = vector.load %arg4[%c0_9, %c0_10] : memref<16x32xbf16, #tpu.memory_space<vmem>>, vector<16x32xbf16>
    tpu.vector_store %arg4[%c0_9, %c0_10], %25 {strides = array<i32>} : memref<16x32xbf16, #tpu.memory_space<vmem>>, vector<16x32xbf16>,
    return
  }
  func.func @transform_0(%arg0: i32) -> (i32, i32) {
    %c0_i32 = arith.constant 0 : i32
    %c0_i32_0 = arith.constant 0 : i32
    return %arg0, %c0_i32 : i32, i32
  }
  func.func @transform_1(%arg0: i32) -> (i32, i32) {
    %c0_i32 = arith.constant 0 : i32
    %c0_i32_0 = arith.constant 0 : i32
    %c0_i32_1 = arith.constant 0 : i32
    return %c0_i32, %c0_i32_0 : i32, i32
  }
  func.func @transform_2(%arg0: i32) -> (i32, i32) {
    %c0_i32 = arith.constant 0 : i32
    %c0_i32_0 = arith.constant 0 : i32
    %c0_i32_1 = arith.constant 0 : i32
    return %c0_i32, %c0_i32_0 : i32, i32
  }
  func.func @transform_3(%arg0: i32) -> (i32, i32) {
    %c0_i32 = arith.constant 0 : i32
    %c0_i32_0 = arith.constant 0 : i32
    return %arg0, %c0_i32 : i32, i32
  }
}

</mosaic_0001>

<llo_original>
// kernel: tpu_custom_call.1
$region0: #{tpu_custom_call.1}
  #allocation0 [shape = 'u32[]', space=smem, size = 0x4, offset = 0x4, fixed_abs, tag = 'smem constant byte address 0x4 - core index']
  #allocation1 [shape = 'u32[144,128]{1,0:T(1,128)}', space=vmem, size = 0x12000, scoped, tag = 'internal scratch']
  %s0 = inlined_call_operand.hbm [shape: f32[16,32], index: 0, kind: input, shape index: {}]
  %s1 = inlined_call_operand.vmem [shape: f32[1,32], index: 1, kind: input, shape index: {}]
  %s2 = inlined_call_operand.vmem [shape: f32[1,32], index: 2, kind: input, shape index: {}]
  %s3 = inlined_call_operand.hbm [shape: bf16[16,32], index: 3, kind: output, shape index: {}]
  %s4 = sld [smem:[#allocation0]]
  $region26: #{tpu_custom_call.1} parent=0
    _
  %s6 = ssub.s32 1, %s4
  %s7 = scalar_select 0, %s6, %s4
  $region1: #{tpu_custom_call.1} parent=0
    #allocation2 [shape = 'u8[8192]{0}', space=vmem, size = 0x2000, scoped, tag = 'input window, operand 0, single buffered']
    #allocation3 [shape = 's32[1]{0}', space=sflag, size = 0x4, scoped, tag = 'scoped memory for tpu_custom_call.1']
    #allocation4 [shape = 's32[1]{0}', space=sflag, size = 0x4, scoped, tag = 'scoped memory for tpu_custom_call.1']
    #allocation5 [shape = 'u8[4096]{0}', space=vmem, size = 0x1000, scoped, tag = 'output window, operand 0, single buffered']
    %8 = vsyncpa [#allocation3], 0
    %9 = vsyncpa [#allocation4], 0
    // Predicated region
    $region2: #{tpu_custom_call.1} parent=1 // pred_check
      _
    $region3: #{tpu_custom_call.1} parent=1 // pred_check_branch
      %11 = sbr.rel (0) target = $region5
    $region4: #{tpu_custom_call.1} parent=1 // pred_region
      %s13 = ssub.s32 256, 256
      %14 = vsyncadd [#allocation3], %s13
      %s15 = sshll.u32 [#allocation2], 4
      %s16 = int_to_ptr.vmem [resolvable:$true] %s15
      %21 = dma.hbm_to_vmem [thread:$0]  %s0, 256, %s16, [#allocation3], 128, 128, 8
    $region5: #{tpu_custom_call.1} parent=1 // pred_fallthru
      _
    // Predicated region
    $region6: #{tpu_custom_call.1} parent=1 // pred_check
      _
    $region7: #{tpu_custom_call.1} parent=1 // pred_check_branch
      %23 = sbr.rel (0) target = $region9
    $region8: #{tpu_custom_call.1} parent=1 // pred_region
      _
    $region9: #{tpu_custom_call.1} parent=1 // pred_fallthru
      _
    // Predicated region
    $region10: #{tpu_custom_call.1} parent=1 // pred_check
      _
    $region11: #{tpu_custom_call.1} parent=1 // pred_check_branch
      %25 = sbr.rel (0) target = $region13
    $region12: #{tpu_custom_call.1} parent=1 // pred_region
      _
    $region13: #{tpu_custom_call.1} parent=1 // pred_fallthru
      _
    // Predicated region
    $region14: #{tpu_custom_call.1} parent=1 // pred_check
      _
    $region15: #{tpu_custom_call.1} parent=1 // pred_check_branch
      %27 = sbr.rel (0) target = $region17
    $region16: #{tpu_custom_call.1} parent=1 // pred_region
      %28 = dma.done [#allocation3], 256
    $region17: #{tpu_custom_call.1} parent=1 // pred_fallthru
      _
    %v29 = vld [vmem:[#allocation2] sm:$0xff]
    %v30 = vld [vmem:[#allocation2 + $0x8] sm:$0xff]
    %vm31 = vcmask 261120
    %v32 = vsel %vm31, %v29, 0.0
    %33 = vadd.xlane.f32.xlu0 %v32
    %v34 = vpop.xlane.xlu0 %33
    %v35 = vsel %vm31, %v30, 0.0
    %36 = vadd.xlane.f32.xlu0 %v35
    %v37 = vpop.xlane.xlu0 %36
    %v38 = vrcp.pop 32.0
    %v39 = vmul.f32 %v34, %v38
    %v40 = vmul.f32 %v37, %v38
    %v41 = vsub.f32 %v29, %v39
    %v42 = vsub.f32 %v30, %v40
    %v43 = vmul.f32 %v41, %v41
    %v44 = vmul.f32 %v42, %v42
    %v45 = vsel %vm31, %v43, 0.0
    %46 = vadd.xlane.f32.xlu0 %v45
    %v47 = vpop.xlane.xlu0 %46
    %v48 = vsel %vm31, %v44, 0.0
    %49 = vadd.xlane.f32.xlu0 %v48
    %v50 = vpop.xlane.xlu0 %49
    %v51 = vmul.f32 %v47, %v38
    %v52 = vmul.f32 %v50, %v38
    %v53 = vadd.f32 %v51, 1e-12
    %v54 = vadd.f32 %v52, 1e-12
    %v55 = vrsqrt.pop %v53
    %v56 = vrsqrt.pop %v54
    %v57 = vmul.f32 %v41, %v55
    %v58 = vmul.f32 %v42, %v56
    %v59 = vld [vmem:[%s1] sm:$0x1]
    %v61 = vlaneseq
    %v62 = vshrl.u32 %v61, 7
    %v63 = vsub.s32 0, %v62
    %v64 = vrot.slane %v59, %v63
    %v66 = vmul.f32 %v57, %v64
    %v67 = vmul.f32 %v58, %v64
    %v68 = vld [vmem:[%s2] sm:$0x1]
    %v70 = vlaneseq
    %v71 = vshrl.u32 %v70, 7
    %v72 = vsub.s32 0, %v71
    %v73 = vrot.slane %v68, %v72
    %v75 = vadd.f32 %v66, %v73
    %v76 = vadd.f32 %v67, %v73
    %v77 = vpack.c.bf16 %v76, %v75
    %v79 = vunpack.c.l.b16 %v77
    %v80 = vunpack.c.h.b16 %v77
    %v81 = vpack.c.b16 %v79, %v79
    %v82 = vpack.c.b16 %v80, %v80
    %vm85 = vcmask 257024
    %86 = vst.msk [vmem:[#allocation5] sm:$0xf] %vm85, %v81
    %87 = vst.msk [vmem:[#allocation5 + $0x4] sm:$0xf] %vm85, %v82
    // Predicated region
    $region18: #{tpu_custom_call.1} parent=1 // pred_check
      _
    $region19: #{tpu_custom_call.1} parent=1 // pred_check_branch
      %89 = sbr.rel (0) target = $region21
    $region20: #{tpu_custom_call.1} parent=1 // pred_region
      %s91 = ssub.s32 128, 128
      %92 = vsyncadd [#allocation4], %s91
      %s93 = sshll.u32 [#allocation5], 4
      %s94 = int_to_ptr.vmem [resolvable:$true] %s93
      %99 = dma.vmem_to_hbm [thread:$0]  %s94, 128, %s3, [#allocation4], 64, 64, 4
    $region21: #{tpu_custom_call.1} parent=1 // pred_fallthru
      _
    // Predicated region
    $region22: #{tpu_custom_call.1} parent=1 // pred_check
      _
    $region23: #{tpu_custom_call.1} parent=1 // pred_check_branch
      %101 = sbr.rel (0) target = $region25
    $region24: #{tpu_custom_call.1} parent=1 // pred_region
      %102 = dma.done [#allocation4], 128
    $region25: #{tpu_custom_call.1} parent=1 // pred_fallthru
      _
    %103 = vsyncpa [#allocation3], 1
    %104 = vsyncpa [#allocation4], 1

</llo_original>
